<compile_context>
chip_gen: v7x
topology: tpu7x:2x2x1
jax: 0.10.0
libtpu: 0.0.40
codegen_flags: <defaults>
</compile_context>

<pallas_src>
import jax
import jax.numpy as jnp
from jax.experimental import pallas as pl
from jax.experimental.pallas import tpu as pltpu


def _residual2_kernel(x_ref, x2_ref, w_ref, b_ref, o_ref):
    # fn(x, x2) = x2 @ W[:, tile] + b[tile]; out = fn + x[:, tile].
    # MXU matmul with f32 accumulation, bias + residual add in f32 on the VPU,
    # one cast on store.
    acc = jnp.dot(x2_ref[...], w_ref[...], preferred_element_type=jnp.float32)
    acc = acc + b_ref[...].astype(jnp.float32)
    o_ref[...] = (acc + x_ref[...].astype(jnp.float32)).astype(o_ref.dtype)


def _round_up(x, m):
    return ((x + m - 1) // m) * m


def _pick_tiles(m, dp, x_itemsize, mxu_itemsize,
                budget_bytes=24 * 1024 * 1024):
    """Pick (TM, TN): TN a 128-multiple dividing dp, TM a 16-multiple whose
    double-buffered working set fits the VMEM budget."""
    tn = next(t for t in (512, 256, 128) if dp % t == 0)
    for tm in (512, 256, 128, 64, 32, 16):
        if tm > _round_up(m, 16):
            continue
        per_buf = (tm * tn * x_itemsize        # x residual tile
                   + tm * dp * mxu_itemsize    # x2 row slab (full K)
                   + dp * tn * mxu_itemsize    # W column slab
                   + tn * 4                    # bias tile
                   + tm * tn * x_itemsize)     # out tile
        if 2 * per_buf <= budget_bytes:
            return tm, tn
    return 16, tn


def residual2(x, x2, w, b, *, mxu_dtype=None):
    """Residual2 with fn(x, x2) = x2 @ w + b:   out = (x2 @ w + b) + x.

    x, x2: [B, N, D];  w: [D, D];  b: [1, D].
    mxu_dtype: optional dtype (e.g. jnp.bfloat16) for the matmul operands
    (x2, w) — halves their HBM traffic and uses the bf16 MXU path on v6e/v7x.
    Accumulation and the residual/bias add always stay f32.
    """
    B, N, D = x.shape
    assert x2.shape == (B, N, D) and w.shape == (D, D) and b.shape == (1, D)

    out_dtype = x.dtype
    M = B * N
    Dp = _round_up(D, 128)

    xf = x.reshape(M, D)
    x2f = x2.reshape(M, D)
    if mxu_dtype is not None:
        x2f = x2f.astype(mxu_dtype)
        w = w.astype(mxu_dtype)

    TM, TN = _pick_tiles(M, Dp, jnp.dtype(out_dtype).itemsize,
                         jnp.dtype(x2f.dtype).itemsize)
    Mp = _round_up(M, TM)

    # Zero-pad to tile-aligned shapes. Zero padding is an exact no-op for the
    # matmul / bias / residual; padded rows and columns are sliced off below.
    if Mp != M or Dp != D:
        xf = jnp.pad(xf, ((0, Mp - M), (0, Dp - D)))
        x2f = jnp.pad(x2f, ((0, Mp - M), (0, Dp - D)))
    if Dp != D:
        w = jnp.pad(w, ((0, Dp - D), (0, Dp - D)))
        b = jnp.pad(b, ((0, 0), (0, Dp - D)))

    gm, gn = Mp // TM, Dp // TN

    out = pl.pallas_call(
        _residual2_kernel,
        out_shape=jax.ShapeDtypeStruct((Mp, Dp), out_dtype),
        grid_spec=pl.GridSpec(
            grid=(gm, gn),
            in_specs=[
                pl.BlockSpec((TM, TN), lambda i, j: (i, j)),   # x (residual)
                pl.BlockSpec((TM, Dp), lambda i, j: (i, 0)),   # x2 row slab
                pl.BlockSpec((Dp, TN), lambda i, j: (0, j)),   # W column slab
                pl.BlockSpec((1, TN), lambda i, j: (0, j)),    # bias slice
            ],
            out_specs=pl.BlockSpec((TM, TN), lambda i, j: (i, j)),
        ),
        compiler_params=pltpu.CompilerParams(
            dimension_semantics=("parallel", "parallel"),
            vmem_limit_bytes=48 * 1024 * 1024,
        ),
    )(xf, x2f, w, b)

    return out[:M, :D].reshape(B, N, D)


def residual2_ref(x, x2, w, b):
    # Pure-JAX reference with identical semantics.
    return jnp.einsum("bnd,de->bne", x2, w) + b[0] + x


if __name__ == "__main__":
    key = jax.random.PRNGKey(0)
    kx, kx2, kw, kb = jax.random.split(key, 4)

    B, N, D = 2, 8, 32
    x = jax.random.normal(kx, (B, N, D), dtype=jnp.float32)
    x2 = jax.random.normal(kx2, (B, N, D), dtype=jnp.float32)
    # Deterministic "fn" parameters (linear layer on x2).
    w = jax.random.normal(kw, (D, D), dtype=jnp.float32) * 0.05
    b = jax.random.normal(kb, (1, D), dtype=jnp.float32) * 0.01

    ref = residual2_ref(x, x2, w, b)

    # Full-precision path (exact vs reference).
    out = residual2(x, x2, w, b)
    jax.block_until_ready(out)
    assert jnp.allclose(out, ref, atol=1e-4, rtol=1e-4), "mismatch vs reference"

    # bf16-MXU path (v6e/v7x fast path): f32 accumulation, looser tolerance.
    out_bf16 = residual2(x, x2, w, b, mxu_dtype=jnp.bfloat16)
    jax.block_until_ready(out_bf16)
    assert jnp.allclose(out_bf16, ref, atol=5e-2, rtol=5e-2), "bf16 path mismatch"

    print("KERNEL_OK")
</pallas_src>

<mosaic_0001>
module attributes {stable_mosaic.version = 11 : i64} {
  func.func @_residual2_kernel(%arg0: i32, %arg1: i32, %arg2: memref<16x128xf32, #tpu.memory_space<vmem>>, %arg3: memref<16x128xf32, #tpu.memory_space<vmem>>, %arg4: memref<128x128xf32, #tpu.memory_space<vmem>>, %arg5: memref<1x128xf32, #tpu.memory_space<vmem>>, %arg6: memref<16x128xf32, #tpu.memory_space<vmem>>) attributes {dimension_semantics = [#tpu.dimension_semantics<parallel>, #tpu.dimension_semantics<parallel>], iteration_bounds = array<i64: 1, 1>, scalar_prefetch = 0 : i64, scratch_operands = 0 : i64, tpu.core_type = #tpu.core_type<tc>, window_params = [{transform_indices = @transform_0, window_bounds = array<i64: 16, 128>}, {transform_indices = @transform_1, window_bounds = array<i64: 16, 128>}, {transform_indices = @transform_2, window_bounds = array<i64: 128, 128>}, {transform_indices = @transform_3, window_bounds = array<i64: 1, 128>}, {transform_indices = @transform_4, window_bounds = array<i64: 16, 128>}]} {
    %c0 = arith.constant 0 : index
    %c0_0 = arith.constant 0 : index
    %0 = vector.load %arg3[%c0, %c0_0] : memref<16x128xf32, #tpu.memory_space<vmem>>, vector<16x128xf32>
    %c0_1 = arith.constant 0 : index
    %c0_2 = arith.constant 0 : index
    %1 = vector.load %arg4[%c0_1, %c0_2] : memref<128x128xf32, #tpu.memory_space<vmem>>, vector<128x128xf32>
    %cst = arith.constant dense<0.000000e+00> : vector<16x128xf32>
    %2 = tpu.matmul %0, %1, %cst {dimension_numbers = #tpu.dot_dimension_numbers<[1], [0], [0], [1], [0, 0, 1, 1], [], []>} : vector<16x128xf32>, vector<128x128xf32>, vector<16x128xf32> -> vector<16x128xf32>
    %c0_3 = arith.constant 0 : index
    %c0_4 = arith.constant 0 : index
    %3 = vector.load %arg5[%c0_3, %c0_4] : memref<1x128xf32, #tpu.memory_space<vmem>>, vector<1x128xf32>
    %4 = vector.broadcast %3 : vector<1x128xf32> to vector<16x128xf32>
    %5 = arith.addf %2, %4 : vector<16x128xf32>
    %c0_5 = arith.constant 0 : index
    %c0_6 = arith.constant 0 : index
    %6 = vector.load %arg2[%c0_5, %c0_6] : memref<16x128xf32, #tpu.memory_space<vmem>>, vector<16x128xf32>
    %7 = arith.addf %5, %6 : vector<16x128xf32>
    %c0_7 = arith.constant 0 : index
    %c0_8 = arith.constant 0 : index
    %8 = vector.load %arg6[%c0_7, %c0_8] : memref<16x128xf32, #tpu.memory_space<vmem>>, vector<16x128xf32>
    tpu.vector_store %arg6[%c0_7, %c0_8], %7 {strides = array<i32>} : memref<16x128xf32, #tpu.memory_space<vmem>>, vector<16x128xf32>,
    return
  }
  func.func @transform_0(%arg0: i32, %arg1: i32) -> (i32, i32) {
    %c0_i32 = arith.constant 0 : i32
    return %arg0, %arg1 : i32, i32
  }
  func.func @transform_1(%arg0: i32, %arg1: i32) -> (i32, i32) {
    %c0_i32 = arith.constant 0 : i32
    %c0_i32_0 = arith.constant 0 : i32
    return %arg0, %c0_i32 : i32, i32
  }
  func.func @transform_2(%arg0: i32, %arg1: i32) -> (i32, i32) {
    %c0_i32 = arith.constant 0 : i32
    %c0_i32_0 = arith.constant 0 : i32
    return %c0_i32, %arg1 : i32, i32
  }
  func.func @transform_3(%arg0: i32, %arg1: i32) -> (i32, i32) {
    %c0_i32 = arith.constant 0 : i32
    %c0_i32_0 = arith.constant 0 : i32
    return %c0_i32, %arg1 : i32, i32
  }
  func.func @transform_4(%arg0: i32, %arg1: i32) -> (i32, i32) {
    %c0_i32 = arith.constant 0 : i32
    return %arg0, %arg1 : i32, i32
  }
}

</mosaic_0001>

<llo_original>
// kernel: tpu_custom_call.1
$region0: #{tpu_custom_call.1}
  #allocation0 [shape = 'u32[]', space=smem, size = 0x4, offset = 0x4, fixed_abs, tag = 'smem constant byte address 0x4 - core index']
  #allocation1 [shape = 'u32[144,128]{1,0:T(1,128)}', space=vmem, size = 0x12000, scoped, tag = 'internal scratch']
  %s0 = inlined_call_operand.hbm [shape: f32[16,128], index: 0, kind: input, shape index: {}]
  %s1 = inlined_call_operand.hbm [shape: f32[16,128], index: 1, kind: input, shape index: {}]
  %s2 = inlined_call_operand.hbm [shape: f32[128,128], index: 2, kind: input, shape index: {}]
  %s3 = inlined_call_operand.vmem [shape: f32[1,128], index: 3, kind: input, shape index: {}]
  %s4 = inlined_call_operand.hbm [shape: f32[16,128], index: 4, kind: output, shape index: {}]
  %s5 = sld [smem:[#allocation0]]
  $region38: #{tpu_custom_call.1} parent=0
    _
  %s7 = ssub.s32 1, %s5
  %s8 = scalar_select 0, %s7, %s5
  $region1: #{tpu_custom_call.1} parent=0
    #allocation2 [shape = 'u8[8192]{0}', space=vmem, size = 0x2000, scoped, tag = 'input window, operand 0, single buffered']
    #allocation3 [shape = 's32[1]{0}', space=sflag, size = 0x4, scoped, tag = 'scoped memory for tpu_custom_call.1']
    #allocation4 [shape = 's32[1]{0}', space=sflag, size = 0x4, scoped, tag = 'scoped memory for tpu_custom_call.1']
    #allocation5 [shape = 'u8[8192]{0}', space=vmem, size = 0x2000, scoped, tag = 'input window, operand 1, single buffered']
    #allocation6 [shape = 's32[1]{0}', space=sflag, size = 0x4, scoped, tag = 'scoped memory for tpu_custom_call.1']
    #allocation7 [shape = 'u8[65536]{0}', space=vmem, size = 0x10000, scoped, tag = 'input window, operand 2, single buffered']
    #allocation8 [shape = 'u8[8192]{0}', space=vmem, size = 0x2000, scoped, tag = 'output window, operand 0, single buffered']
    %9 = vsyncpa [#allocation3], 0
    %10 = vsyncpa [#allocation6], 0
    %11 = vsyncpa [#allocation4], 0
    // Predicated region
    $region2: #{tpu_custom_call.1} parent=1 // pred_check
      _
    $region3: #{tpu_custom_call.1} parent=1 // pred_check_branch
      %13 = sbr.rel (0) target = $region5
    $region4: #{tpu_custom_call.1} parent=1 // pred_region
      %s15 = ssub.s32 256, 256
      %16 = vsyncadd [#allocation3], %s15
      %s17 = sshll.u32 [#allocation2], 4
      %s18 = int_to_ptr.vmem [resolvable:$true] %s17
      %23 = dma.hbm_to_vmem [thread:$0]  %s0, 256, %s18, [#allocation3], 128, 128, 8
    $region5: #{tpu_custom_call.1} parent=1 // pred_fallthru
      _
    // Predicated region
    $region6: #{tpu_custom_call.1} parent=1 // pred_check
      _
    $region7: #{tpu_custom_call.1} parent=1 // pred_check_branch
      %25 = sbr.rel (0) target = $region9
    $region8: #{tpu_custom_call.1} parent=1 // pred_region
      %s27 = ssub.s32 256, 256
      %28 = vsyncadd [#allocation6], %s27
      %s29 = sshll.u32 [#allocation5], 4
      %s30 = int_to_ptr.vmem [resolvable:$true] %s29
      %35 = dma.hbm_to_vmem [thread:$0]  %s1, 256, %s30, [#allocation6], 128, 128, 8
    $region9: #{tpu_custom_call.1} parent=1 // pred_fallthru
      _
    // Predicated region
    $region10: #{tpu_custom_call.1} parent=1 // pred_check
      _
    $region11: #{tpu_custom_call.1} parent=1 // pred_check_branch
      %37 = sbr.rel (0) target = $region13
    $region12: #{tpu_custom_call.1} parent=1 // pred_region
      %s39 = ssub.s32 2048, 2048
      %40 = vsyncadd [#allocation6], %s39
      %s41 = sshll.u32 [#allocation7], 4
      %s42 = int_to_ptr.vmem [resolvable:$true] %s41
      %47 = dma.hbm_to_vmem [thread:$0]  %s2, 2048, %s42, [#allocation6], 128, 128, 8
    $region13: #{tpu_custom_call.1} parent=1 // pred_fallthru
      _
    // Predicated region
    $region14: #{tpu_custom_call.1} parent=1 // pred_check
      _
    $region15: #{tpu_custom_call.1} parent=1 // pred_check_branch
      %49 = sbr.rel (0) target = $region17
    $region16: #{tpu_custom_call.1} parent=1 // pred_region
      _
    $region17: #{tpu_custom_call.1} parent=1 // pred_fallthru
      _
    // Predicated region
    $region18: #{tpu_custom_call.1} parent=1 // pred_check
      _
    $region19: #{tpu_custom_call.1} parent=1 // pred_check_branch
      %51 = sbr.rel (0) target = $region21
    $region20: #{tpu_custom_call.1} parent=1 // pred_region
      %52 = dma.done [#allocation3], 256
    $region21: #{tpu_custom_call.1} parent=1 // pred_fallthru
      _
    // Predicated region
    $region22: #{tpu_custom_call.1} parent=1 // pred_check
      _
    $region23: #{tpu_custom_call.1} parent=1 // pred_check_branch
      %54 = sbr.rel (0) target = $region25
    $region24: #{tpu_custom_call.1} parent=1 // pred_region
      %55 = dma.done [#allocation6], 256
    $region25: #{tpu_custom_call.1} parent=1 // pred_fallthru
      _
    // Predicated region
    $region26: #{tpu_custom_call.1} parent=1 // pred_check
      _
    $region27: #{tpu_custom_call.1} parent=1 // pred_check_branch
      %57 = sbr.rel (0) target = $region29
    $region28: #{tpu_custom_call.1} parent=1 // pred_region
      %58 = dma.done [#allocation6], 2048
    $region29: #{tpu_custom_call.1} parent=1 // pred_fallthru
      _
    %v59 = vld [vmem:[#allocation5] sm:$0xff]
    %v60 = vld [vmem:[#allocation5 + $0x8] sm:$0xff]
    %v61 = vld [vmem:[#allocation7] sm:$0xff]
    %v62 = vld [vmem:[#allocation7 + $0x8] sm:$0xff]
    %v63 = vld [vmem:[#allocation7 + $0x10] sm:$0xff]
    %v64 = vld [vmem:[#allocation7 + $0x18] sm:$0xff]
    %v65 = vld [vmem:[#allocation7 + $0x20] sm:$0xff]
    %v66 = vld [vmem:[#allocation7 + $0x28] sm:$0xff]
    %v67 = vld [vmem:[#allocation7 + $0x30] sm:$0xff]
    %v68 = vld [vmem:[#allocation7 + $0x38] sm:$0xff]
    %v69 = vld [vmem:[#allocation7 + $0x40] sm:$0xff]
    %v70 = vld [vmem:[#allocation7 + $0x48] sm:$0xff]
    %v71 = vld [vmem:[#allocation7 + $0x50] sm:$0xff]
    %v72 = vld [vmem:[#allocation7 + $0x58] sm:$0xff]
    %v73 = vld [vmem:[#allocation7 + $0x60] sm:$0xff]
    %v74 = vld [vmem:[#allocation7 + $0x68] sm:$0xff]
    %v75 = vld [vmem:[#allocation7 + $0x70] sm:$0xff]
    %v76 = vld [vmem:[#allocation7 + $0x78] sm:$0xff]
    %v77 = vld [vmem:[%s3] sm:$0x1]
    %v79 = vlaneseq
    %v80 = vshrl.u32 %v79, 7
    %v81 = vsub.s32 0, %v80
    %v82 = vrot.slane %v77, %v81
    %84 = vmatprep.subr.mxu0 0.0
    %85 = vmatpush1.msra.mxu0 %v61
    %86 = vmatprep.subr.mxu0 0.0
    %87 = vmatpush1.msra.mxu0 %v62
    %88 = vmatprep.subr.mxu0 0.0
    %89 = vmatpush1.msra.mxu0 %v63
    %90 = vmatprep.subr.mxu0 0.0
    %91 = vmatpush1.msra.mxu0 %v64
    %92 = vmatprep.subr.mxu0 0.0
    %93 = vmatpush1.msra.mxu0 %v65
    %94 = vmatprep.subr.mxu0 0.0
    %95 = vmatpush1.msra.mxu0 %v66
    %96 = vmatprep.subr.mxu0 0.0
    %97 = vmatpush1.msra.mxu0 %v67
    %98 = vmatprep.subr.mxu0 0.0
    %99 = vmatpush1.msra.mxu0 %v68
    %100 = vmatprep.subr.mxu0 0.0
    %101 = vmatpush1.msra.mxu0 %v69
    %102 = vmatprep.subr.mxu0 0.0
    %103 = vmatpush1.msra.mxu0 %v70
    %104 = vmatprep.subr.mxu0 0.0
    %105 = vmatpush1.msra.mxu0 %v71
    %106 = vmatprep.subr.mxu0 0.0
    %107 = vmatpush1.msra.mxu0 %v72
    %108 = vmatprep.subr.mxu0 0.0
    %109 = vmatpush1.msra.mxu0 %v73
    %110 = vmatprep.subr.mxu0 0.0
    %111 = vmatpush1.msra.mxu0 %v74
    %112 = vmatprep.subr.mxu0 0.0
    %113 = vmatpush1.msra.mxu0 %v75
    %114 = vmatprep.subr.mxu0 0.0
    %115 = vmatpush1.msra.mxu0 %v76
    %116 = vmatprep.subr.mxu0 0.0
    %117 = vmatpush1.msra.mxu0 0.0
    %118 = vmatprep.subr.mxu0 0.0
    %119 = vmatpush1.msra.mxu0 0.0
    %120 = vmatprep.subr.mxu0 0.0
    %121 = vmatpush1.msra.mxu0 0.0
    %122 = vmatprep.subr.mxu0 0.0
    %123 = vmatpush1.msra.mxu0 0.0
    %124 = vmatprep.subr.mxu0 0.0
    %125 = vmatpush1.msra.mxu0 0.0
    %126 = vmatprep.subr.mxu0 0.0
    %127 = vmatpush1.msra.mxu0 0.0
    %128 = vmatprep.subr.mxu0 0.0
    %129 = vmatpush1.msra.mxu0 0.0
    %130 = vmatprep.subr.mxu0 0.0
    %131 = vmatpush1.msra.mxu0 0.0
    %132 = vmatprep.subr.mxu0 0.0
    %133 = vmatpush1.msra.mxu0 0.0
    %134 = vmatprep.subr.mxu0 0.0
    %135 = vmatpush1.msra.mxu0 0.0
    %136 = vmatprep.subr.mxu0 0.0
    %137 = vmatpush1.msra.mxu0 0.0
    %138 = vmatprep.subr.mxu0 0.0
    %139 = vmatpush1.msra.mxu0 0.0
    %140 = vmatprep.subr.mxu0 0.0
    %141 = vmatpush1.msra.mxu0 0.0
    %142 = vmatprep.subr.mxu0 0.0
    %143 = vmatpush1.msra.mxu0 0.0
    %144 = vmatprep.subr.mxu0 0.0
    %145 = vmatpush1.msra.mxu0 0.0
    %146 = vmatprep.subr.mxu0 0.0
    %147 = vmatpush1.msra.mxu0 0.0
    %148 = vmatprep.mubr.f32.mxu0 0.0
    %149 = vmatmul.mubr.f32.gmra.mrb[0].mxu0 %v59
    %v150 = vpop.f32.mrb[0].mxu0
    %v151 = vadd.f32 %v82, %v150
    %v152 = vpop.f32.mrb[0].mxu0
    %153 = vmatprep.mubr.f32.mxu0 0.0
    %154 = vmatmul.mubr.f32.gmra.mrb[0].mxu0 %v60
    %v155 = vpop.f32.mrb[0].mxu0
    %v156 = vadd.f32 %v82, %v155
    %v157 = vpop.f32.mrb[0].mxu0
    %158 = vdwg.mxu0
    %v159 = vld [vmem:[#allocation2] sm:$0xff]
    %v160 = vld [vmem:[#allocation2 + $0x8] sm:$0xff]
    %v161 = vadd.f32 %v151, %v159
    %v162 = vadd.f32 %v156, %v160
    %163 = vst [vmem:[#allocation8] sm:$0xff] %v161
    %164 = vst [vmem:[#allocation8 + $0x8] sm:$0xff] %v162
    // Predicated region
    $region30: #{tpu_custom_call.1} parent=1 // pred_check
      _
    $region31: #{tpu_custom_call.1} parent=1 // pred_check_branch
      %166 = sbr.rel (0) target = $region33
    $region32: #{tpu_custom_call.1} parent=1 // pred_region
      %s168 = ssub.s32 256, 256
      %169 = vsyncadd [#allocation4], %s168
      %s170 = sshll.u32 [#allocation8], 4
      %s171 = int_to_ptr.vmem [resolvable:$true] %s170
      %176 = dma.vmem_to_hbm [thread:$0]  %s171, 256, %s4, [#allocation4], 128, 128, 8
    $region33: #{tpu_custom_call.1} parent=1 // pred_fallthru
      _
    // Predicated region
    $region34: #{tpu_custom_call.1} parent=1 // pred_check
      _
    $region35: #{tpu_custom_call.1} parent=1 // pred_check_branch
      %178 = sbr.rel (0) target = $region37
    $region36: #{tpu_custom_call.1} parent=1 // pred_region
      %179 = dma.done [#allocation4], 256
    $region37: #{tpu_custom_call.1} parent=1 // pred_fallthru
      _
    %180 = vsyncpa [#allocation3], 1
    %181 = vsyncpa [#allocation6], 1
    %182 = vsyncpa [#allocation4], 1

</llo_original>
